<compile_context>
chip_gen: v6e
topology: v6e:2x2x1
jax: 0.10.0
libtpu: 0.0.40
codegen_flags: <defaults>
</compile_context>

<pallas_src>
import jax
import jax.numpy as jnp
from jax.experimental import pallas as pl
from jax.experimental.pallas import tpu as pltpu


def _gamma_embed_kernel(g_ref, x_ref, o_ref):
    # x_ref / o_ref block: (Ct, Lt)  (batch dim squeezed out by the BlockSpec)
    # g_ref block:         (Ct, 1)   -> broadcast along the lane axis (VPU splat)
    o_ref[...] = x_ref[...] * g_ref[...]


def _pick_tile(dim, target, quantum):
    """Largest tile <= target that divides `dim` and is a multiple of `quantum`.
    Falls back to the full dim (always a legal BlockSpec block size)."""
    if dim <= target:
        return dim
    t = (target // quantum) * quantum
    while t >= quantum:
        if dim % t == 0:
            return t
        t -= quantum
    return dim


def gamma_embed(x, gamma, *, max_c_tile=256, max_l_tile=1024):
    """x: (N, C, H, W), gamma: (C,) -> x * gamma.reshape(1, -1, 1, 1)."""
    N, C, H, W = x.shape
    assert gamma.shape == (C,)
    L = H * W

    # PyTorch-style type promotion for the multiply (no-op for the f32 test path).
    out_dtype = jnp.result_type(x.dtype, gamma.dtype)
    x3 = x.reshape(N, C, L).astype(out_dtype)        # lane-dense last axis
    g2 = gamma.reshape(C, 1).astype(out_dtype)       # pre-shaped + pre-cast once

    # Lane-dense tiles: last dim a large multiple of 128 (or full L), second-to-last
    # a multiple of 8 (or full C).  <=1 MiB f32 per tile keeps 2x(in+out) double
    # buffering well within v7x's 64 MiB VMEM.
    Ct = _pick_tile(C, max_c_tile, 8)
    Lt = _pick_tile(L, max_l_tile, 128)
    grid = (N, C // Ct, L // Lt)

    itemsize = jnp.dtype(out_dtype).itemsize
    cost = pl.CostEstimate(
        flops=N * C * L,
        transcendentals=0,
        bytes_accessed=2 * N * C * L * itemsize + C * itemsize,
    )

    out = pl.pallas_call(
        _gamma_embed_kernel,
        out_shape=jax.ShapeDtypeStruct((N, C, L), out_dtype),
        grid_spec=pltpu.PrefetchScalarGridSpec(
            num_scalar_prefetch=0,
            grid=grid,
            in_specs=[
                # gamma tile: one channel block, reused across N and L grid axes.
                pl.BlockSpec((Ct, 1), lambda n, c, l: (c, 0)),
                # x tile: batch dim squeezed, (Ct, Lt) lane-dense block.
                pl.BlockSpec((None, Ct, Lt), lambda n, c, l: (n, c, l)),
            ],
            out_specs=pl.BlockSpec((None, Ct, Lt), lambda n, c, l: (n, c, l)),
        ),
        compiler_params=pltpu.CompilerParams(
            dimension_semantics=("parallel", "parallel", "parallel"),
        ),
        cost_estimate=cost,
    )(g2, x3)

    return out.reshape(N, C, H, W)


if __name__ == "__main__":
    key = jax.random.PRNGKey(0)
    kx, kg = jax.random.split(key)

    N, C, H, W = 2, 4, 16, 16
    x = jax.random.normal(kx, (N, C, H, W), dtype=jnp.float32)
    # Deterministic "parameter" gamma (learned per-channel scale).
    gamma = jax.random.normal(kg, (C,), dtype=jnp.float32)

    out = jax.block_until_ready(gamma_embed(x, gamma))

    # Reference: plain JAX broadcasting, identical to the PyTorch module.
    ref = x * gamma.reshape(1, -1, 1, 1)
    assert out.shape == x.shape
    assert out.dtype == ref.dtype
    assert jnp.allclose(out, ref, atol=1e-6, rtol=1e-6)

    print("KERNEL_OK")
</pallas_src>

<mosaic_0001>
module attributes {stable_mosaic.version = 11 : i64} {
  func.func @_gamma_embed_kernel(%arg0: i32, %arg1: i32, %arg2: i32, %arg3: memref<4x1xf32, #tpu.memory_space<vmem>>, %arg4: memref<1x4x256xf32, #tpu.memory_space<vmem>>, %arg5: memref<1x4x256xf32, #tpu.memory_space<vmem>>) attributes {dimension_semantics = [#tpu.dimension_semantics<parallel>, #tpu.dimension_semantics<parallel>, #tpu.dimension_semantics<parallel>], iteration_bounds = array<i64: 2, 1, 1>, scalar_prefetch = 0 : i64, scratch_operands = 0 : i64, tpu.core_type = #tpu.core_type<tc>, window_params = [{transform_indices = @transform_0, window_bounds = array<i64: 4, 1>}, {transform_indices = @transform_1, window_bounds = array<i64: 1, 4, 256>}, {transform_indices = @transform_2, window_bounds = array<i64: 1, 4, 256>}]} {
    %c0 = arith.constant 0 : index
    %c0_0 = arith.constant 0 : index
    %c0_1 = arith.constant 0 : index
    %0 = vector.load %arg4[%c0, %c0_0, %c0_1] : memref<1x4x256xf32, #tpu.memory_space<vmem>>, vector<1x4x256xf32>
    %1 = vector.shape_cast %0 : vector<1x4x256xf32> to vector<4x256xf32>
    %c0_2 = arith.constant 0 : index
    %c0_3 = arith.constant 0 : index
    %2 = vector.load %arg3[%c0_2, %c0_3] : memref<4x1xf32, #tpu.memory_space<vmem>>, vector<4x1xf32>
    %3 = vector.broadcast %2 : vector<4x1xf32> to vector<4x256xf32>
    %4 = arith.mulf %1, %3 : vector<4x256xf32>
    %c0_4 = arith.constant 0 : index
    %c0_5 = arith.constant 0 : index
    %c0_6 = arith.constant 0 : index
    %5 = vector.load %arg5[%c0_4, %c0_5, %c0_6] : memref<1x4x256xf32, #tpu.memory_space<vmem>>, vector<1x4x256xf32>
    %6 = vector.shape_cast %5 : vector<1x4x256xf32> to vector<4x256xf32>
    %7 = vector.shape_cast %4 : vector<4x256xf32> to vector<1x4x256xf32>
    tpu.vector_store %arg5[%c0_4, %c0_5, %c0_6], %7 {strides = array<i32>} : memref<1x4x256xf32, #tpu.memory_space<vmem>>, vector<1x4x256xf32>,
    return
  }
  func.func @transform_0(%arg0: i32, %arg1: i32, %arg2: i32) -> (i32, i32) {
    %c0_i32 = arith.constant 0 : i32
    %c0_i32_0 = arith.constant 0 : i32
    return %arg1, %c0_i32 : i32, i32
  }
  func.func @transform_1(%arg0: i32, %arg1: i32, %arg2: i32) -> (i32, i32, i32) {
    %c0_i32 = arith.constant 0 : i32
    return %arg0, %arg1, %arg2 : i32, i32, i32
  }
  func.func @transform_2(%arg0: i32, %arg1: i32, %arg2: i32) -> (i32, i32, i32) {
    %c0_i32 = arith.constant 0 : i32
    return %arg0, %arg1, %arg2 : i32, i32, i32
  }
}

</mosaic_0001>

<llo_original>
// kernel: tpu_custom_call.1
$region0: #{tpu_custom_call.1}
  #allocation0 [shape = 'u32[]', space=smem, size = 0x4, offset = 0x4, fixed_abs, tag = 'smem constant byte address 0x4 - core index']
  #allocation1 [shape = 'u32[144,128]{1,0:T(1,128)}', space=vmem, size = 0x12000, scoped, tag = 'internal scratch']
  %s0 = inlined_call_operand.vmem [shape: f32[4,1], index: 0, kind: input, shape index: {}]
  %s1 = inlined_call_operand.hbm [shape: f32[2,4,256], index: 1, kind: input, shape index: {}]
  %s2 = inlined_call_operand.hbm [shape: f32[2,4,256], index: 2, kind: output, shape index: {}]
  %s3 = sld [smem:[#allocation0]]
  $region45: #{tpu_custom_call.1} parent=0
    _
  %s5 = ssub.s32 1, %s3
  %s6 = scalar_select 0, %s5, %s3
  $region1: #{tpu_custom_call.1} parent=0
    #allocation2 [shape = 'u8[8192]{0}', space=vmem, size = 0x2000, scoped, tag = 'input window, operand 1']
    #allocation3 [shape = 's32[2]{0}', space=sflag, size = 0x8, scoped, tag = 'scoped memory for tpu_custom_call.1']
    #allocation4 [shape = 's32[2]{0}', space=sflag, size = 0x8, scoped, tag = 'scoped memory for tpu_custom_call.1']
    #allocation5 [shape = 'u8[8192]{0}', space=vmem, size = 0x2000, scoped, tag = 'output window, operand 0']
    %7 = vsyncpa [#allocation3], 0
    %s8 = scalar_lea.sflag [#allocation3], 1
    %9 = vsyncpa %s8, 0
    %10 = vsyncpa [#allocation4], 0
    %s11 = scalar_lea.sflag [#allocation4], 1
    %12 = vsyncpa %s11, 0
    loop: start=0, step=1, limit=4
    $region2: #{tpu_custom_call.1} parent=1 // loop_pre_header
      _
    $region3: #{tpu_custom_call.1} parent=1 // loop_header
      %s14 = sphi 0, %s18
      %p15 = scmp.ge.s32.totalorder %s14, 4
      %s21 = sphi 0, %s40
      %s22 = sphi 0, %s36
      %s23 = sphi 0, %s32
      %s24 = sphi 0, %s21
      %s25 = sphi 0, %s22
      %s26 = sphi 0, %s23
      %s27 = sphi 0, %s24
      %s28 = sphi 0, %s25
      %s29 = sphi 0, %s26
      %s43 = sphi 0, %s45
      %s46 = sphi 0, %s43
      %s47 = sphi 0, %s46
      %s63 = sphi 0, %s47
      %s73 = sphi 0, %s75
      %s76 = sphi 0, %s73
      %s77 = sphi 0, %s76
      %s93 = sphi 0, %s77
      %s103 = sphi 0, %s105
      %s106 = sphi 0, %s103
      %s107 = sphi 0, %s106
      %s123 = sphi 0, %s107
    $region4: #{tpu_custom_call.1} parent=1 // loop_header_branch
      %17 = sbr.rel (%p15) target = $region8
    $region5: #{tpu_custom_call.1} parent=1 // loop_body
      %s19 = ssub.s32 %s14, 1
      %s20 = ssub.s32 %s14, 2
      %s30 = sadd.s32 1, %s23
      %p31 = scmp.ge.s32.totalorder %s30, 1
      %s32 = scalar_select %p31, 0, %s30
      %s33 = sadd.s32 1, %s22
      %s34 = scalar_select %p31, %s33, %s22
      %p35 = scmp.ge.s32.totalorder %s34, 1
      %s36 = scalar_select %p35, 0, %s34
      %s37 = sadd.s32 1, %s21
      %s38 = scalar_select %p35, %s37, %s21
      %p39 = scmp.ge.s32.totalorder %s38, 2
      %s40 = scalar_select %p39, 0, %s38
      %s41 = ssub.s32 %s22, %s36
      %p42 = scmp.eq.s32.totalorder %s41, 0
      %s44 = sadd.s32 %s43, 1
      %s45 = scalar_select %p42, %s43, %s44
      %p48 = pneg %p42
      %p49 = scmp.eq.s32.totalorder %s14, 1
      %p50 = por %p48, %p49
      %p51 = scmp.ne.s32.totalorder %s43, %s46
      %p52 = scmp.eq.s32.totalorder %s14, 0
      %p53 = por %p51, %p52
      %p54 = scmp.ne.s32.totalorder %s43, %s46
      %p55 = scmp.eq.s32.totalorder %s19, 1
      %p56 = por %p54, %p55
      %p57 = scmp.ne.s32.totalorder %s46, %s47
      %p58 = scmp.eq.s32.totalorder %s19, 0
      %p59 = por %p57, %p58
      %p60 = scmp.ne.s32.totalorder %s46, %s47
      %p61 = scmp.eq.s32.totalorder %s20, 1
      %p62 = por %p60, %p61
      %p64 = scmp.ne.s32.totalorder %s47, %s63
      %p65 = scmp.eq.s32.totalorder %s20, 0
      %p66 = por %p64, %p65
      %s67 = ssub.s32 %s21, %s40
      %s68 = ssub.s32 %s22, %s36
      %s69 = sor.u32 %s67, %s68
      %s70 = ssub.s32 %s23, %s32
      %s71 = sor.u32 %s69, %s70
      %p72 = scmp.eq.s32.totalorder %s71, 0
      %s74 = sadd.s32 %s73, 1
      %s75 = scalar_select %p72, %s73, %s74
      %p78 = pneg %p72
      %p79 = scmp.eq.s32.totalorder %s14, 1
      %p80 = por %p78, %p79
      %p81 = scmp.ne.s32.totalorder %s73, %s76
      %p82 = scmp.eq.s32.totalorder %s14, 0
      %p83 = por %p81, %p82
      %p84 = scmp.ne.s32.totalorder %s73, %s76
      %p85 = scmp.eq.s32.totalorder %s19, 1
      %p86 = por %p84, %p85
      %p87 = scmp.ne.s32.totalorder %s76, %s77
      %p88 = scmp.eq.s32.totalorder %s19, 0
      %p89 = por %p87, %p88
      %p90 = scmp.ne.s32.totalorder %s76, %s77
      %p91 = scmp.eq.s32.totalorder %s20, 1
      %p92 = por %p90, %p91
      %p94 = scmp.ne.s32.totalorder %s77, %s93
      %p95 = scmp.eq.s32.totalorder %s20, 0
      %p96 = por %p94, %p95
      %s97 = ssub.s32 %s21, %s40
      %s98 = ssub.s32 %s22, %s36
      %s99 = sor.u32 %s97, %s98
      %s100 = ssub.s32 %s23, %s32
      %s101 = sor.u32 %s99, %s100
      %p102 = scmp.eq.s32.totalorder %s101, 0
      %s104 = sadd.s32 %s103, 1
      %s105 = scalar_select %p102, %s103, %s104
      %p108 = pneg %p102
      %p109 = scmp.eq.s32.totalorder %s14, 1
      %p110 = por %p108, %p109
      %p111 = scmp.ne.s32.totalorder %s103, %s106
      %p112 = scmp.eq.s32.totalorder %s14, 0
      %p113 = por %p111, %p112
      %p114 = scmp.ne.s32.totalorder %s103, %s106
      %p115 = scmp.eq.s32.totalorder %s19, 1
      %p116 = por %p114, %p115
      %p117 = scmp.ne.s32.totalorder %s106, %s107
      %p118 = scmp.eq.s32.totalorder %s19, 0
      %p119 = por %p117, %p118
      %p120 = scmp.ne.s32.totalorder %s106, %s107
      %p121 = scmp.eq.s32.totalorder %s20, 1
      %p122 = por %p120, %p121
      %p124 = scmp.ne.s32.totalorder %s107, %s123
      %p125 = scmp.eq.s32.totalorder %s20, 0
      %p126 = por %p124, %p125
      %p127 = scmp.le.s32.totalorder 1, %s14
      %p128 = scmp.lt.s32.totalorder %s14, 3
      %p129 = pnand %p127, %p128
      %p130 = pneg %p129
      // Predicated region
      $region9: #{tpu_custom_call.1} parent=5 // pred_check
        _
      $region10: #{tpu_custom_call.1} parent=5 // pred_check_branch
        %132 = sbr.rel (%p129) target = $region12
      $region11: #{tpu_custom_call.1} parent=5 // pred_region
        %s133 = ssub.s32 %s14, 1
        // Predicated region
        $region13: #{tpu_custom_call.1} parent=11 // pred_check
          %p134 = pneg %p59
        $region14: #{tpu_custom_call.1} parent=11 // pred_check_branch
          %136 = sbr.rel (%p134) target = $region16
        $region15: #{tpu_custom_call.1} parent=11 // pred_region
          %p137 = scmp.lt.s32.totalorder %s25, 0
          %s138 = scalar_select %p137, %s25, 0
          %s139 = smul.addr %s138, 4
          %s140 = scalar_lea.vmem %s0, %s139
        $region16: #{tpu_custom_call.1} parent=11 // pred_fallthru
          _
      $region12: #{tpu_custom_call.1} parent=5 // pred_fallthru
        _
      %p141 = scmp.lt.s32.totalorder %s14, 2
      // Predicated region
      $region17: #{tpu_custom_call.1} parent=5 // pred_check
        %p142 = pneg %p141
      $region18: #{tpu_custom_call.1} parent=5 // pred_check_branch
        %144 = sbr.rel (%p142) target = $region20
      $region19: #{tpu_custom_call.1} parent=5 // pred_region
        // Predicated region
        $region21: #{tpu_custom_call.1} parent=19 // pred_check
          %p145 = pneg %p83
        $region22: #{tpu_custom_call.1} parent=19 // pred_check_branch
          %147 = sbr.rel (%p145) target = $region24
        $region23: #{tpu_custom_call.1} parent=19 // pred_region
          %s148 = sand.u32 %s73, 1
          %s149 = scalar_lea.sflag [#allocation3], %s148
          %s150 = sand.u32 %s73, 1
          %s151 = smul.addr %s150, 8
          %s152 = scalar_lea.vmem [#allocation2], %s151
          %s153 = smul.u32 2, %s23
          %s155 = ssub.s32 128, 128
          %156 = vsyncadd %s149, %s155
          %s157 = smul.addr %s22, 2
          %s158 = sadd.s32 %s153, %s157
          %s159 = smul.addr %s21, 2
          %s160 = sadd.s32 %s158, %s159
          %s161 = smul.addr %s160, 64
          %s162 = scalar_lea.hbm %s1, %s161
          %s164 = sshll.u32 %s152, 4
          %s165 = int_to_ptr.vmem [resolvable:$true] %s164
          %167 = dma.hbm_to_vmem [thread:$0]  %s162, 128, %s165, %s149
        $region24: #{tpu_custom_call.1} parent=19 // pred_fallthru
          _
      $region20: #{tpu_custom_call.1} parent=5 // pred_fallthru
        _
      %p168 = scmp.le.s32.totalorder 1, %s14
      %p169 = scmp.lt.s32.totalorder %s14, 3
      %p170 = pnand %p168, %p169
      %p171 = pneg %p170
      // Predicated region
      $region25: #{tpu_custom_call.1} parent=5 // pred_check
        _
      $region26: #{tpu_custom_call.1} parent=5 // pred_check_branch
        %173 = sbr.rel (%p170) target = $region28
      $region27: #{tpu_custom_call.1} parent=5 // pred_region
        %s174 = ssub.s32 %s14, 1
        %s175 = sand.u32 %s76, 1
        %s176 = scalar_lea.sflag [#allocation3], %s175
        %s177 = sand.u32 %s76, 1
        %s178 = smul.addr %s177, 8
        %s179 = scalar_lea.vmem [#allocation2], %s178
        // Predicated region
        $region29: #{tpu_custom_call.1} parent=27 // pred_check
          %p180 = pneg %p89
        $region30: #{tpu_custom_call.1} parent=27 // pred_check_branch
          %182 = sbr.rel (%p180) target = $region32
        $region31: #{tpu_custom_call.1} parent=27 // pred_region
          %183 = dma.done %s176, 128
        $region32: #{tpu_custom_call.1} parent=27 // pred_fallthru
          _
        %p184 = scmp.lt.s32.totalorder %s25, 0
        %s185 = scalar_select %p184, %s25, 0
        %s186 = smul.addr %s185, 4
        %s187 = scalar_lea.vmem %s0, %s186
        %p188 = pneg %p59
        %p189 = pneg %p56
        %s190 = sand.u32 %s76, 1
        %s191 = scalar_lea.sflag [#allocation3], %s190
        %s192 = sand.u32 %s76, 1
        %s193 = smul.addr %s192, 8
        %s194 = scalar_lea.vmem [#allocation2], %s193
        %p195 = pneg %p89
        %p196 = pneg %p86
        %p197 = pneg %p119
        %p198 = pneg %p116
        %s199 = sand.u32 %s106, 1
        %s200 = scalar_lea.sflag [#allocation4], %s199
        %s201 = sand.u32 %s106, 1
        %s202 = smul.addr %s201, 8
        %s203 = scalar_lea.vmem [#allocation5], %s202
        %p204 = scmp.lt.s32.totalorder %s25, 0
        %s205 = scalar_select %p204, %s25, 0
        %s206 = smul.addr %s205, 4
        %s207 = scalar_lea.vmem %s0, %s206
        %s208 = smul.u32 2, %s26
        %s209 = smul.u32 2, %s26
        %v210 = vld [vmem:[%s179] sm:$0xff]
        %v211 = vld [vmem:[%s207] sm:$0xf]
        %213 = vset.pattern.permute.xlu0 0
        %214 = vperm.xlu0 %213, %v211
        %v215 = vpop.permute.xlu0 %214
        %v217 = vunpack.c.l.s4 839922192
        %v218 = vunpack.c.0.s8 %v217
        %v219 = vlaneseq
        %v220 = vshrl.u32 %v219, 7
        %v221 = vsub.s32 %v218, %v220
        %v222 = vrot.slane %v215, %v221
        %v224 = vmul.f32 %v210, %v222
        %225 = vst [vmem:[%s203] sm:$0xff] %v224
        %s226 = sand.u32 %s106, 1
        %s227 = scalar_lea.sflag [#allocation4], %s226
        %s228 = sand.u32 %s106, 1
        %s229 = smul.addr %s228, 8
        %s230 = scalar_lea.vmem [#allocation5], %s229
        // Predicated region
        $region33: #{tpu_custom_call.1} parent=27 // pred_check
          %p231 = pneg %p116
        $region34: #{tpu_custom_call.1} parent=27 // pred_check_branch
          %233 = sbr.rel (%p231) target = $region36
        $region35: #{tpu_custom_call.1} parent=27 // pred_region
          %s234 = smul.u32 2, %s26
          %s236 = ssub.s32 128, 128
          %237 = vsyncadd %s227, %s236
          %s238 = smul.addr %s25, 2
          %s239 = sadd.s32 %s234, %s238
          %s240 = smul.addr %s24, 2
          %s241 = sadd.s32 %s239, %s240
          %s242 = smul.addr %s241, 64
          %s243 = scalar_lea.hbm %s2, %s242
          %s245 = sshll.u32 %s230, 4
          %s246 = int_to_ptr.vmem [resolvable:$true] %s245
          %248 = dma.vmem_to_hbm [thread:$0]  %s246, 128, %s243, %s227
        $region36: #{tpu_custom_call.1} parent=27 // pred_fallthru
          _
      $region28: #{tpu_custom_call.1} parent=5 // pred_fallthru
        _
      %p249 = scmp.le.s32.totalorder 2, %s14
      // Predicated region
      $region37: #{tpu_custom_call.1} parent=5 // pred_check
        %p250 = pneg %p249
      $region38: #{tpu_custom_call.1} parent=5 // pred_check_branch
        %252 = sbr.rel (%p250) target = $region40
      $region39: #{tpu_custom_call.1} parent=5 // pred_region
        %s253 = ssub.s32 %s14, 2
        // Predicated region
        $region41: #{tpu_custom_call.1} parent=39 // pred_check
          %p254 = pneg %p122
        $region42: #{tpu_custom_call.1} parent=39 // pred_check_branch
          %256 = sbr.rel (%p254) target = $region44
        $region43: #{tpu_custom_call.1} parent=39 // pred_region
          %s257 = sand.u32 %s107, 1
          %s258 = scalar_lea.sflag [#allocation4], %s257
          %s259 = sand.u32 %s107, 1
          %s260 = smul.addr %s259, 8
          %s261 = scalar_lea.vmem [#allocation5], %s260
          %262 = dma.done %s258, 128
        $region44: #{tpu_custom_call.1} parent=39 // pred_fallthru
          _
      $region40: #{tpu_custom_call.1} parent=5 // pred_fallthru
        _
    $region6: #{tpu_custom_call.1} parent=1 // loop_footer
      %s18 = sadd.s32 1, %s14
    $region7: #{tpu_custom_call.1} parent=1 // loop_footer_branch
      %13 = sbr.rel target = $region3
    $region8: #{tpu_custom_call.1} parent=1 // loop_exit
      _
    %263 = vsyncpa [#allocation3], 1
    %s264 = scalar_lea.sflag [#allocation3], 1
    %265 = vsyncpa %s264, 1
    %266 = vsyncpa [#allocation4], 1
    %s267 = scalar_lea.sflag [#allocation4], 1
    %268 = vsyncpa %s267, 1

</llo_original>
